<compile_context>
chip_gen: v5e
topology: v5e:2x2
jax: 0.10.0
libtpu: 0.0.40
codegen_flags: <defaults>
</compile_context>

<pallas_src>
import functools

import jax
import jax.numpy as jnp
from jax import lax
from jax.experimental import pallas as pl
from jax.experimental.pallas import tpu as pltpu

_LANE = 128
_TARGET_BYTES = 8 * 1024 * 1024      # per input buffer (Pallas double-buffers it)
_MAX_TK = 8192                       # max reduction-tile width in elements (mult of 128)
_VMEM_LIMIT = 40 * 1024 * 1024       # leaves headroom under v7x's 64 MiB physical VMEM


def _round_up(a, b):
    return ((a + b - 1) // b) * b


def _round_down(a, b):
    return (a // b) * b


def _sublane(itemsize):
    # Sublane multiple for the dtype: 8 (f32), 16 (bf16/f16), 32 (int8/fp8).
    return max(8, 32 // itemsize)


def _pick_rows(rows, lane_elems, itemsize, sub):
    """Rows per block: lane-padding-aware VMEM budget + >=2 row blocks for megacore."""
    bytes_per_row = _round_up(lane_elems, _LANE) * itemsize   # count lane padding
    tm = max(sub, _round_down(_TARGET_BYTES // bytes_per_row, sub))
    if tm >= rows:
        tm = rows
        if rows >= 2 * sub:                 # give the second v7x TensorCore a block
            tm = _round_up(pl.cdiv(rows, 2), sub)
    return tm


def _cost(R, S, itemsize):
    return pl.CostEstimate(flops=R * S, transcendentals=0,
                           bytes_accessed=R * S * itemsize + R * itemsize)


# --------------------------------------------------------------------------------------
# Path A: large spatial extent (S > _MAX_TK) -> 2-D grid, multi-step reduction.
# --------------------------------------------------------------------------------------
def _gap_multi_kernel(x_ref, o_ref, acc_ref, *, S, TK, inv_s, masked):
    """Accumulate (TM, TK) tiles into a lane-dense scratch; finalize mean on last k."""
    k = pl.program_id(1)
    nk = pl.num_programs(1)

    @pl.when(k == 0)
    def _():
        acc_ref[...] = jnp.zeros_like(acc_ref)

    def accumulate(x):
        # Lane-dense accumulation: pure VPU adds of 128-lane chunks into a (TM, 128)
        # f32 scratch.  No cross-lane (XLU) work and no 1-lane RMW per step.
        acc = acc_ref[...]
        for c in range(TK // _LANE):
            acc = acc + x[:, c * _LANE:(c + 1) * _LANE].astype(jnp.float32)
        acc_ref[...] = acc

    if masked:
        # S % TK != 0: only the last step sees out-of-bounds lanes, so the
        # iota/compare/select mask is gated to that step only.
        @pl.when(k < nk - 1)
        def _():
            accumulate(x_ref[...])

        @pl.when(k == nk - 1)
        def _():
            x = x_ref[...]
            col = lax.broadcasted_iota(jnp.int32, x.shape, 1)
            x = jnp.where(k * TK + col < S, x, jnp.zeros_like(x))
            accumulate(x)
    else:
        accumulate(x_ref[...])

    @pl.when(k == nk - 1)
    def _():
        total = jnp.sum(acc_ref[...], axis=-1, keepdims=True)   # single XLU reduce
        o_ref[...] = (total * inv_s).astype(o_ref.dtype)


def _pick_tk(S):
    """Reduction tile width: prefer a multiple of 128 that divides S (no tail mask)."""
    tk = _round_down(min(S, _MAX_TK), _LANE)
    while tk >= _LANE:
        if S % tk == 0:
            break
        tk -= _LANE
    if tk >= _MAX_TK // 4:          # good exact divisor -> fully unmasked kernel
        return tk, False
    return _MAX_TK, True            # fall back: mask only the (single) padded last step


def _gap_multi_step(x2, R, S):
    dtype = x2.dtype
    itemsize = jnp.dtype(dtype).itemsize
    TK, masked = _pick_tk(S)
    TM = _pick_rows(R, TK, itemsize, _sublane(itemsize))
    grid = (pl.cdiv(R, TM), pl.cdiv(S, TK))

    kernel = functools.partial(_gap_multi_kernel, S=S, TK=TK, inv_s=1.0 / S,
                               masked=masked)
    return pl.pallas_call(
        kernel,
        out_shape=jax.ShapeDtypeStruct((R, 1), dtype),
        grid_spec=pltpu.PrefetchScalarGridSpec(
            num_scalar_prefetch=0,
            grid=grid,
            in_specs=[pl.BlockSpec((TM, TK), lambda i, k: (i, k))],
            out_specs=pl.BlockSpec((TM, 1), lambda i, k: (i, 0)),
            scratch_shapes=[pltpu.VMEM((TM, _LANE), jnp.float32)],
        ),
        compiler_params=pltpu.CompilerParams(
            dimension_semantics=("parallel", "arbitrary"),
            vmem_limit_bytes=_VMEM_LIMIT),
        cost_estimate=_cost(R, S, itemsize),
    )(x2)


# --------------------------------------------------------------------------------------
# Path B: spatial extent fits one tile (S <= _MAX_TK) -> 1-D grid, no accumulator.
# --------------------------------------------------------------------------------------
def _gap_rowsum_kernel(x_ref, o_ref, *, inv_s):
    s = jnp.sum(x_ref[...], axis=-1, keepdims=True, dtype=jnp.float32)
    o_ref[...] = (s * inv_s).astype(o_ref.dtype)


def _gap_fold_kernel(x_ref, seg_ref, o_ref, *, inv_s):
    """Per-original-row (segment) sums of folded rows, computed on the MXU."""
    x = x_ref[...]
    seg = seg_ref[...]                    # (G*S, ncol) 0/1 block-diagonal, bf16, resident
    if x.dtype == jnp.bfloat16:
        acc = jnp.dot(x, seg, preferred_element_type=jnp.float32)
    else:
        # bf16 hi/lo split: keeps ~f32 accuracy while using native bf16 MXU passes.
        xf = x.astype(jnp.float32)
        hi = xf.astype(jnp.bfloat16)
        lo = (xf - hi.astype(jnp.float32)).astype(jnp.bfloat16)
        acc = (jnp.dot(hi, seg, preferred_element_type=jnp.float32) +
               jnp.dot(lo, seg, preferred_element_type=jnp.float32))
    o_ref[...] = (acc * inv_s).astype(o_ref.dtype)


def _gap_single_step(x2, R, S):
    dtype = x2.dtype
    itemsize = jnp.dtype(dtype).itemsize
    sub = _sublane(itemsize)

    # Fold G whole rows into each kernel row for small S so HBM rows are contiguous
    # multi-KiB and the output block is lane-dense (7x7 / 14x14 GlobalAvgPool shapes).
    G = 1
    if S < 1024 and R > 1:
        divisors = [g for g in range(1, min(R, _MAX_TK // S) + 1) if R % g == 0]
        dense = [g for g in divisors if g * S >= 1024]
        G = min(dense) if dense else max(divisors)

    rows, lanes = R // G, G * S
    TM = _pick_rows(rows, lanes, itemsize, sub)
    grid = (pl.cdiv(rows, TM),)
    xf = x2.reshape(rows, lanes)
    params = pltpu.CompilerParams(dimension_semantics=("parallel",),
                                  vmem_limit_bytes=_VMEM_LIMIT)

    if G == 1:
        return pl.pallas_call(
            functools.partial(_gap_rowsum_kernel, inv_s=1.0 / S),
            out_shape=jax.ShapeDtypeStruct((rows, 1), dtype),
            grid_spec=pltpu.PrefetchScalarGridSpec(
                num_scalar_prefetch=0, grid=grid,
                in_specs=[pl.BlockSpec((TM, lanes), lambda i: (i, 0))],
                out_specs=pl.BlockSpec((TM, 1), lambda i: (i, 0)),
            ),
            compiler_params=params, cost_estimate=_cost(R, S, itemsize),
        )(xf)

    # Block-diagonal 0/1 matrix: seg[j, g] = (j // S == g).  Columns padded to a
    # multiple of 128 so the output block is lane-dense and MXU-aligned.  Its block
    # index is (0, 0) on every grid step, so Pallas keeps it resident (no re-DMA).
    ncol = _round_up(G, _LANE)
    j = jnp.arange(lanes) // S
    seg = (j[:, None] == jnp.arange(ncol)[None, :]).astype(jnp.bfloat16)

    out = pl.pallas_call(
        functools.partial(_gap_fold_kernel, inv_s=1.0 / S),
        out_shape=jax.ShapeDtypeStruct((rows, ncol), dtype),
        grid_spec=pltpu.PrefetchScalarGridSpec(
            num_scalar_prefetch=0, grid=grid,
            in_specs=[pl.BlockSpec((TM, lanes), lambda i: (i, 0)),
                      pl.BlockSpec((lanes, ncol), lambda i: (0, 0))],
            out_specs=pl.BlockSpec((TM, ncol), lambda i: (i, 0)),
        ),
        compiler_params=params, cost_estimate=_cost(R, S, itemsize),
    )(xf, seg)
    return out[:, :G].reshape(R, 1)


# --------------------------------------------------------------------------------------
# Public entry point: equivalent of F.avg_pool2d(x, kernel_size=x.size()[2:]).
# --------------------------------------------------------------------------------------
def global_avg_pool2d(x):
    N, C, H, W = x.shape
    R, S = N * C, H * W
    x2 = x.reshape(R, S)
    out = _gap_multi_step(x2, R, S) if S > _MAX_TK else _gap_single_step(x2, R, S)
    return out.reshape(N, C, 1, 1)


if __name__ == "__main__":
    key = jax.random.PRNGKey(0)

    # 1) Small NCHW input (single-step path, row folding G>1, 128-aligned S).
    x = jax.random.normal(key, (2, 4, 16, 16), dtype=jnp.float32)
    y = jax.block_until_ready(global_avg_pool2d(x))
    y_ref = jnp.mean(x, axis=(2, 3), keepdims=True)
    assert y.shape == (2, 4, 1, 1), y.shape
    assert jnp.allclose(y, y_ref, atol=1e-5, rtol=1e-5), "mismatch (fold, aligned S)"

    # 2) Large spatial extent -> multi-step reduction with an exact-divisor TK
    #    (S=9216 -> TK=4608, fully unmasked kernel).
    x2 = jax.random.normal(jax.random.PRNGKey(1), (1, 2, 96, 96), dtype=jnp.float32)
    y2 = jax.block_until_ready(global_avg_pool2d(x2))
    y2_ref = jnp.mean(x2, axis=(2, 3), keepdims=True)
    assert jnp.allclose(y2, y2_ref, atol=1e-5, rtol=1e-5), "mismatch (tiled reduction)"

    # 3) Large spatial extent with no 128-multiple divisor -> gated masked final step.
    x3 = jax.random.normal(jax.random.PRNGKey(2), (2, 3, 95, 95), dtype=jnp.float32)
    y3 = jax.block_until_ready(global_avg_pool2d(x3))
    y3_ref = jnp.mean(x3, axis=(2, 3), keepdims=True)
    assert jnp.allclose(y3, y3_ref, atol=1e-5, rtol=1e-5), "mismatch (masked tail)"

    # 4) Typical GlobalAvgPool tail shape (7x7) -> folded small-S path, unaligned S.
    x4 = jax.random.normal(jax.random.PRNGKey(3), (8, 32, 7, 7), dtype=jnp.float32)
    y4 = jax.block_until_ready(global_avg_pool2d(x4))
    y4_ref = jnp.mean(x4, axis=(2, 3), keepdims=True)
    assert jnp.allclose(y4, y4_ref, atol=1e-5, rtol=1e-5), "mismatch (fold, 7x7)"

    print("KERNEL_OK")
</pallas_src>

<mosaic_0001>
module attributes {stable_mosaic.version = 11 : i64} {
  func.func @_gap_fold_kernel(%arg0: i32, %arg1: memref<2x1024xf32, #tpu.memory_space<vmem>>, %arg2: memref<1024x128xbf16, #tpu.memory_space<vmem>>, %arg3: memref<2x128xf32, #tpu.memory_space<vmem>>) attributes {dimension_semantics = [#tpu.dimension_semantics<parallel>], iteration_bounds = array<i64: 1>, scalar_prefetch = 0 : i64, scratch_operands = 0 : i64, tpu.core_type = #tpu.core_type<tc>, window_params = [{transform_indices = @transform_0, window_bounds = array<i64: 2, 1024>}, {pipeline_mode = #tpu.pipeline_mode<synchronous>, transform_indices = @transform_1, window_bounds = array<i64: 1024, 128>}, {transform_indices = @transform_2, window_bounds = array<i64: 2, 128>}]} {
    %c0 = arith.constant 0 : index
    %c0_0 = arith.constant 0 : index
    %0 = vector.load %arg1[%c0, %c0_0] : memref<2x1024xf32, #tpu.memory_space<vmem>>, vector<2x1024xf32>
    %c0_1 = arith.constant 0 : index
    %c0_2 = arith.constant 0 : index
    %1 = vector.load %arg2[%c0_1, %c0_2] : memref<1024x128xbf16, #tpu.memory_space<vmem>>, vector<1024x128xbf16>
    %2 = arith.truncf %0 : vector<2x1024xf32> to vector<2x1024xbf16>
    %3 = arith.extf %2 : vector<2x1024xbf16> to vector<2x1024xf32>
    %4 = arith.subf %0, %3 : vector<2x1024xf32>
    %5 = arith.truncf %4 : vector<2x1024xf32> to vector<2x1024xbf16>
    %cst = arith.constant dense<0.000000e+00> : vector<2x128xf32>
    %6 = tpu.matmul %2, %1, %cst {dimension_numbers = #tpu.dot_dimension_numbers<[1], [0], [0], [1], [0, 0, 1, 1], [], []>} : vector<2x1024xbf16>, vector<1024x128xbf16>, vector<2x128xf32> -> vector<2x128xf32>
    %cst_3 = arith.constant dense<0.000000e+00> : vector<2x128xf32>
    %7 = tpu.matmul %5, %1, %cst_3 {dimension_numbers = #tpu.dot_dimension_numbers<[1], [0], [0], [1], [0, 0, 1, 1], [], []>} : vector<2x1024xbf16>, vector<1024x128xbf16>, vector<2x128xf32> -> vector<2x128xf32>
    %8 = arith.addf %6, %7 : vector<2x128xf32>
    %cst_4 = arith.constant 3.906250e-03 : f32
    %9 = vector.broadcast %cst_4 : f32 to vector<2x128xf32>
    %10 = arith.mulf %8, %9 : vector<2x128xf32>
    %c0_5 = arith.constant 0 : index
    %c0_6 = arith.constant 0 : index
    %11 = vector.load %arg3[%c0_5, %c0_6] : memref<2x128xf32, #tpu.memory_space<vmem>>, vector<2x128xf32>
    tpu.vector_store %arg3[%c0_5, %c0_6], %10 {strides = array<i32>} : memref<2x128xf32, #tpu.memory_space<vmem>>, vector<2x128xf32>,
    return
  }
  func.func @transform_0(%arg0: i32) -> (i32, i32) {
    %c0_i32 = arith.constant 0 : i32
    %c0_i32_0 = arith.constant 0 : i32
    return %arg0, %c0_i32 : i32, i32
  }
  func.func @transform_1(%arg0: i32) -> (i32, i32) {
    %c0_i32 = arith.constant 0 : i32
    %c0_i32_0 = arith.constant 0 : i32
    %c0_i32_1 = arith.constant 0 : i32
    return %c0_i32, %c0_i32_0 : i32, i32
  }
  func.func @transform_2(%arg0: i32) -> (i32, i32) {
    %c0_i32 = arith.constant 0 : i32
    %c0_i32_0 = arith.constant 0 : i32
    return %arg0, %c0_i32 : i32, i32
  }
}

</mosaic_0001>

<llo_original>
// kernel: tpu_custom_call.1
$region0: #{tpu_custom_call.1}
  #allocation0 [shape = 'u32[]', space=smem, size = 0x4, offset = 0x4, fixed_abs, tag = 'smem constant byte address 0x4 - core index']
  #allocation1 [shape = 'u32[72,128]{1,0:T(1,128)}', space=vmem, size = 0x9000, scoped, tag = 'internal scratch']
  %s0 = inlined_call_operand.hbm [shape: f32[2,1024], index: 0, kind: input, shape index: {}]
  %s1 = inlined_call_operand.hbm [shape: bf16[1024,128], index: 1, kind: input, shape index: {}]
  %s2 = inlined_call_operand.hbm [shape: f32[2,128], index: 2, kind: output, shape index: {}]
  %s3 = sld [smem:[#allocation0]]
  $region26: #{tpu_custom_call.1} parent=0
    _
  %s5 = ssub.s32 1, %s3
  %s6 = scalar_select 0, %s5, %s3
  $region1: #{tpu_custom_call.1} parent=0
    #allocation2 [shape = 'u8[8192]{0}', space=vmem, size = 0x2000, scoped, tag = 'input window, operand 0, single buffered']
    #allocation3 [shape = 's32[1]{0}', space=sflag, size = 0x4, scoped, tag = 'scoped memory for tpu_custom_call.1']
    #allocation4 [shape = 's32[1]{0}', space=sflag, size = 0x4, scoped, tag = 'scoped memory for tpu_custom_call.1']
    #allocation5 [shape = 'u8[262144]{0}', space=vmem, size = 0x40000, scoped, tag = 'input window, operand 1, single buffered']
    #allocation6 [shape = 's32[1]{0}', space=sflag, size = 0x4, scoped, tag = 'scoped memory for tpu_custom_call.1']
    #allocation7 [shape = 'u8[1024]{0}', space=vmem, size = 0x400, scoped, tag = 'output window, operand 0, single buffered']
    %7 = vsyncpa [#allocation3], 0
    %8 = vsyncpa [#allocation6], 0
    %9 = vsyncpa [#allocation4], 0
    // Predicated region
    $region2: #{tpu_custom_call.1} parent=1 // pred_check
      _
    $region3: #{tpu_custom_call.1} parent=1 // pred_check_branch
      %11 = sbr.rel (0) target = $region5
    $region4: #{tpu_custom_call.1} parent=1 // pred_region
      %13 = vsyncadd [#allocation3], 0
      %s15 = sshll.u32 %s0, 4
      %s16 = int_to_ptr.hbm [resolvable:$true] %s15
      %s17 = sshll.u32 [#allocation2], 4
      %s18 = int_to_ptr.vmem [resolvable:$true] %s17
      %20 = dma.hbm_to_vmem [thread:$0]  %s16, 256, %s18, [#allocation3]
    $region5: #{tpu_custom_call.1} parent=1 // pred_fallthru
      _
    // Predicated region
    $region6: #{tpu_custom_call.1} parent=1 // pred_check
      _
    $region7: #{tpu_custom_call.1} parent=1 // pred_check_branch
      %22 = sbr.rel (0) target = $region9
    $region8: #{tpu_custom_call.1} parent=1 // pred_region
      %24 = vsyncadd [#allocation6], 0
      %s25 = sshll.u32 %s1, 4
      %s26 = int_to_ptr.hbm [resolvable:$true] %s25
      %s27 = sshll.u32 [#allocation5], 4
      %s28 = int_to_ptr.vmem [resolvable:$true] %s27
      %33 = dma.hbm_to_vmem [thread:$0]  %s26, 8192, %s28, [#allocation6], 64, 64, 4
    $region9: #{tpu_custom_call.1} parent=1 // pred_fallthru
      _
    // Predicated region
    $region10: #{tpu_custom_call.1} parent=1 // pred_check
      _
    $region11: #{tpu_custom_call.1} parent=1 // pred_check_branch
      %35 = sbr.rel (0) target = $region13
    $region12: #{tpu_custom_call.1} parent=1 // pred_region
      %37 = dma.done [#allocation3], 256
    $region13: #{tpu_custom_call.1} parent=1 // pred_fallthru
      _
    // Predicated region
    $region14: #{tpu_custom_call.1} parent=1 // pred_check
      _
    $region15: #{tpu_custom_call.1} parent=1 // pred_check_branch
      %39 = sbr.rel (0) target = $region17
    $region16: #{tpu_custom_call.1} parent=1 // pred_region
      %41 = dma.done [#allocation6], 8192
    $region17: #{tpu_custom_call.1} parent=1 // pred_fallthru
      _
    %v42 = vld [vmem:[#allocation2] sm:$0xff]
    %v43 = vld [vmem:[#allocation2 + $0x8] sm:$0xff]
    %v44 = vld [vmem:[#allocation5] sm:$0xf]
    %v45 = vld [vmem:[#allocation5 + $0x4] sm:$0xf]
    %v46 = vld [vmem:[#allocation5 + $0x8] sm:$0xf]
    %v47 = vld [vmem:[#allocation5 + $0xc] sm:$0xf]
    %v48 = vld [vmem:[#allocation5 + $0x10] sm:$0xf]
    %v49 = vld [vmem:[#allocation5 + $0x14] sm:$0xf]
    %v50 = vld [vmem:[#allocation5 + $0x18] sm:$0xf]
    %v51 = vld [vmem:[#allocation5 + $0x1c] sm:$0xf]
    %v52 = vld [vmem:[#allocation5 + $0x20] sm:$0xf]
    %v53 = vld [vmem:[#allocation5 + $0x24] sm:$0xf]
    %v54 = vld [vmem:[#allocation5 + $0x28] sm:$0xf]
    %v55 = vld [vmem:[#allocation5 + $0x2c] sm:$0xf]
    %v56 = vld [vmem:[#allocation5 + $0x30] sm:$0xf]
    %v57 = vld [vmem:[#allocation5 + $0x34] sm:$0xf]
    %v58 = vld [vmem:[#allocation5 + $0x38] sm:$0xf]
    %v59 = vld [vmem:[#allocation5 + $0x3c] sm:$0xf]
    %v60 = vld [vmem:[#allocation5 + $0x40] sm:$0xf]
    %v61 = vld [vmem:[#allocation5 + $0x44] sm:$0xf]
    %v62 = vld [vmem:[#allocation5 + $0x48] sm:$0xf]
    %v63 = vld [vmem:[#allocation5 + $0x4c] sm:$0xf]
    %v64 = vld [vmem:[#allocation5 + $0x50] sm:$0xf]
    %v65 = vld [vmem:[#allocation5 + $0x54] sm:$0xf]
    %v66 = vld [vmem:[#allocation5 + $0x58] sm:$0xf]
    %v67 = vld [vmem:[#allocation5 + $0x5c] sm:$0xf]
    %v68 = vld [vmem:[#allocation5 + $0x60] sm:$0xf]
    %v69 = vld [vmem:[#allocation5 + $0x64] sm:$0xf]
    %v70 = vld [vmem:[#allocation5 + $0x68] sm:$0xf]
    %v71 = vld [vmem:[#allocation5 + $0x6c] sm:$0xf]
    %v72 = vld [vmem:[#allocation5 + $0x70] sm:$0xf]
    %v73 = vld [vmem:[#allocation5 + $0x74] sm:$0xf]
    %v74 = vld [vmem:[#allocation5 + $0x78] sm:$0xf]
    %v75 = vld [vmem:[#allocation5 + $0x7c] sm:$0xf]
    %v76 = vld [vmem:[#allocation5 + $0x80] sm:$0xf]
    %v77 = vld [vmem:[#allocation5 + $0x84] sm:$0xf]
    %v78 = vld [vmem:[#allocation5 + $0x88] sm:$0xf]
    %v79 = vld [vmem:[#allocation5 + $0x8c] sm:$0xf]
    %v80 = vld [vmem:[#allocation5 + $0x90] sm:$0xf]
    %v81 = vld [vmem:[#allocation5 + $0x94] sm:$0xf]
    %v82 = vld [vmem:[#allocation5 + $0x98] sm:$0xf]
    %v83 = vld [vmem:[#allocation5 + $0x9c] sm:$0xf]
    %v84 = vld [vmem:[#allocation5 + $0xa0] sm:$0xf]
    %v85 = vld [vmem:[#allocation5 + $0xa4] sm:$0xf]
    %v86 = vld [vmem:[#allocation5 + $0xa8] sm:$0xf]
    %v87 = vld [vmem:[#allocation5 + $0xac] sm:$0xf]
    %v88 = vld [vmem:[#allocation5 + $0xb0] sm:$0xf]
    %v89 = vld [vmem:[#allocation5 + $0xb4] sm:$0xf]
    %v90 = vld [vmem:[#allocation5 + $0xb8] sm:$0xf]
    %v91 = vld [vmem:[#allocation5 + $0xbc] sm:$0xf]
    %v92 = vld [vmem:[#allocation5 + $0xc0] sm:$0xf]
    %v93 = vld [vmem:[#allocation5 + $0xc4] sm:$0xf]
    %v94 = vld [vmem:[#allocation5 + $0xc8] sm:$0xf]
    %v95 = vld [vmem:[#allocation5 + $0xcc] sm:$0xf]
    %v96 = vld [vmem:[#allocation5 + $0xd0] sm:$0xf]
    %v97 = vld [vmem:[#allocation5 + $0xd4] sm:$0xf]
    %v98 = vld [vmem:[#allocation5 + $0xd8] sm:$0xf]
    %v99 = vld [vmem:[#allocation5 + $0xdc] sm:$0xf]
    %v100 = vld [vmem:[#allocation5 + $0xe0] sm:$0xf]
    %v101 = vld [vmem:[#allocation5 + $0xe4] sm:$0xf]
    %v102 = vld [vmem:[#allocation5 + $0xe8] sm:$0xf]
    %v103 = vld [vmem:[#allocation5 + $0xec] sm:$0xf]
    %v104 = vld [vmem:[#allocation5 + $0xf0] sm:$0xf]
    %v105 = vld [vmem:[#allocation5 + $0xf4] sm:$0xf]
    %v106 = vld [vmem:[#allocation5 + $0xf8] sm:$0xf]
    %v107 = vld [vmem:[#allocation5 + $0xfc] sm:$0xf]
    %v108 = vld [vmem:[#allocation5 + $0x100] sm:$0xf]
    %v109 = vld [vmem:[#allocation5 + $0x104] sm:$0xf]
    %v110 = vld [vmem:[#allocation5 + $0x108] sm:$0xf]
    %v111 = vld [vmem:[#allocation5 + $0x10c] sm:$0xf]
    %v112 = vld [vmem:[#allocation5 + $0x110] sm:$0xf]
    %v113 = vld [vmem:[#allocation5 + $0x114] sm:$0xf]
    %v114 = vld [vmem:[#allocation5 + $0x118] sm:$0xf]
    %v115 = vld [vmem:[#allocation5 + $0x11c] sm:$0xf]
    %v116 = vld [vmem:[#allocation5 + $0x120] sm:$0xf]
    %v117 = vld [vmem:[#allocation5 + $0x124] sm:$0xf]
    %v118 = vld [vmem:[#allocation5 + $0x128] sm:$0xf]
    %v119 = vld [vmem:[#allocation5 + $0x12c] sm:$0xf]
    %v120 = vld [vmem:[#allocation5 + $0x130] sm:$0xf]
    %v121 = vld [vmem:[#allocation5 + $0x134] sm:$0xf]
    %v122 = vld [vmem:[#allocation5 + $0x138] sm:$0xf]
    %v123 = vld [vmem:[#allocation5 + $0x13c] sm:$0xf]
    %v124 = vld [vmem:[#allocation5 + $0x140] sm:$0xf]
    %v125 = vld [vmem:[#allocation5 + $0x144] sm:$0xf]
    %v126 = vld [vmem:[#allocation5 + $0x148] sm:$0xf]
    %v127 = vld [vmem:[#allocation5 + $0x14c] sm:$0xf]
    %v128 = vld [vmem:[#allocation5 + $0x150] sm:$0xf]
    %v129 = vld [vmem:[#allocation5 + $0x154] sm:$0xf]
    %v130 = vld [vmem:[#allocation5 + $0x158] sm:$0xf]
    %v131 = vld [vmem:[#allocation5 + $0x15c] sm:$0xf]
    %v132 = vld [vmem:[#allocation5 + $0x160] sm:$0xf]
    %v133 = vld [vmem:[#allocation5 + $0x164] sm:$0xf]
    %v134 = vld [vmem:[#allocation5 + $0x168] sm:$0xf]
    %v135 = vld [vmem:[#allocation5 + $0x16c] sm:$0xf]
    %v136 = vld [vmem:[#allocation5 + $0x170] sm:$0xf]
    %v137 = vld [vmem:[#allocation5 + $0x174] sm:$0xf]
    %v138 = vld [vmem:[#allocation5 + $0x178] sm:$0xf]
    %v139 = vld [vmem:[#allocation5 + $0x17c] sm:$0xf]
    %v140 = vld [vmem:[#allocation5 + $0x180] sm:$0xf]
    %v141 = vld [vmem:[#allocation5 + $0x184] sm:$0xf]
    %v142 = vld [vmem:[#allocation5 + $0x188] sm:$0xf]
    %v143 = vld [vmem:[#allocation5 + $0x18c] sm:$0xf]
    %v144 = vld [vmem:[#allocation5 + $0x190] sm:$0xf]
    %v145 = vld [vmem:[#allocation5 + $0x194] sm:$0xf]
    %v146 = vld [vmem:[#allocation5 + $0x198] sm:$0xf]
    %v147 = vld [vmem:[#allocation5 + $0x19c] sm:$0xf]
    %v148 = vld [vmem:[#allocation5 + $0x1a0] sm:$0xf]
    %v149 = vld [vmem:[#allocation5 + $0x1a4] sm:$0xf]
    %v150 = vld [vmem:[#allocation5 + $0x1a8] sm:$0xf]
    %v151 = vld [vmem:[#allocation5 + $0x1ac] sm:$0xf]
    %v152 = vld [vmem:[#allocation5 + $0x1b0] sm:$0xf]
    %v153 = vld [vmem:[#allocation5 + $0x1b4] sm:$0xf]
    %v154 = vld [vmem:[#allocation5 + $0x1b8] sm:$0xf]
    %v155 = vld [vmem:[#allocation5 + $0x1bc] sm:$0xf]
    %v156 = vld [vmem:[#allocation5 + $0x1c0] sm:$0xf]
    %v157 = vld [vmem:[#allocation5 + $0x1c4] sm:$0xf]
    %v158 = vld [vmem:[#allocation5 + $0x1c8] sm:$0xf]
    %v159 = vld [vmem:[#allocation5 + $0x1cc] sm:$0xf]
    %v160 = vld [vmem:[#allocation5 + $0x1d0] sm:$0xf]
    %v161 = vld [vmem:[#allocation5 + $0x1d4] sm:$0xf]
    %v162 = vld [vmem:[#allocation5 + $0x1d8] sm:$0xf]
    %v163 = vld [vmem:[#allocation5 + $0x1dc] sm:$0xf]
    %v164 = vld [vmem:[#allocation5 + $0x1e0] sm:$0xf]
    %v165 = vld [vmem:[#allocation5 + $0x1e4] sm:$0xf]
    %v166 = vld [vmem:[#allocation5 + $0x1e8] sm:$0xf]
    %v167 = vld [vmem:[#allocation5 + $0x1ec] sm:$0xf]
    %v168 = vld [vmem:[#allocation5 + $0x1f0] sm:$0xf]
    %v169 = vld [vmem:[#allocation5 + $0x1f4] sm:$0xf]
    %v170 = vld [vmem:[#allocation5 + $0x1f8] sm:$0xf]
    %v171 = vld [vmem:[#allocation5 + $0x1fc] sm:$0xf]
    %174 = vst [vmem:[#allocation1] ss:$4 sm:$0xff] %v42
    %s175 = scalar_lea.vmem [#allocation1], 32
    %176 = vst [vmem:[%s175] ss:$4 sm:$0xff] %v43
    %v177 = vld.sshfl [vmem:[#allocation1] sm:$0xff pattern:$0x73625140]
    %v178 = vld.sshfl [vmem:[#allocation1 + $0x8] sm:$0xff pattern:$0x73625140]
    %v179 = vld.sshfl [vmem:[#allocation1 + $0x10] sm:$0xff pattern:$0x73625140]
    %v180 = vld.sshfl [vmem:[#allocation1 + $0x18] sm:$0xff pattern:$0x73625140]
    %v181 = vld.sshfl [vmem:[#allocation1 + $0x20] sm:$0xff pattern:$0x73625140]
    %v182 = vld.sshfl [vmem:[#allocation1 + $0x28] sm:$0xff pattern:$0x73625140]
    %v183 = vld.sshfl [vmem:[#allocation1 + $0x30] sm:$0xff pattern:$0x73625140]
    %v184 = vld.sshfl [vmem:[#allocation1 + $0x38] sm:$0xff pattern:$0x73625140]
    %v193 = vpack.c.bf16 %v178, %v177
    %v194 = vpack.c.bf16 %v180, %v179
    %v195 = vpack.c.bf16 %v182, %v181
    %v196 = vpack.c.bf16 %v184, %v183
    %v197 = vunpack.c.l.bf16 %v193
    %v198 = vunpack.c.h.bf16 %v193
    %v199 = vunpack.c.l.bf16 %v194
    %v200 = vunpack.c.h.bf16 %v194
    %v201 = vunpack.c.l.bf16 %v195
    %v202 = vunpack.c.h.bf16 %v195
    %v203 = vunpack.c.l.bf16 %v196
    %v204 = vunpack.c.h.bf16 %v196
    %v213 = vrot.slane %v198, 6
    %v214 = vrot.slane %v199, 4
    %v215 = vrot.slane %v200, 2
    %v216 = vrot.slane %v202, 6
    %v217 = vrot.slane %v203, 4
    %v218 = vrot.slane %v204, 2
    %vm219 = vcmask 1041408
    %v220 = vsel %vm219, %v197, %v213
    %vm221 = vcmask 1045508
    %v222 = vsel %vm221, %v214, %v215
    %vm223 = vcmask 1043456
    %v224 = vsel %vm223, %v220, %v222
    %v225 = vsel %vm219, %v201, %v216
    %v226 = vsel %vm221, %v217, %v218
    %v227 = vsel %vm223, %v225, %v226
    %v230 = vsub.f32 %v42, %v224
    %v231 = vsub.f32 %v43, %v227
    %234 = vst [vmem:[#allocation1] ss:$4 sm:$0xff] %v230
    %s235 = scalar_lea.vmem [#allocation1], 32
    %236 = vst [vmem:[%s235] ss:$4 sm:$0xff] %v231
    %v237 = vld.sshfl [vmem:[#allocation1] sm:$0xff pattern:$0x73625140]
    %v238 = vld.sshfl [vmem:[#allocation1 + $0x8] sm:$0xff pattern:$0x73625140]
    %v239 = vld.sshfl [vmem:[#allocation1 + $0x10] sm:$0xff pattern:$0x73625140]
    %v240 = vld.sshfl [vmem:[#allocation1 + $0x18] sm:$0xff pattern:$0x73625140]
    %v241 = vld.sshfl [vmem:[#allocation1 + $0x20] sm:$0xff pattern:$0x73625140]
    %v242 = vld.sshfl [vmem:[#allocation1 + $0x28] sm:$0xff pattern:$0x73625140]
    %v243 = vld.sshfl [vmem:[#allocation1 + $0x30] sm:$0xff pattern:$0x73625140]
    %v244 = vld.sshfl [vmem:[#allocation1 + $0x38] sm:$0xff pattern:$0x73625140]
    %v253 = vpack.c.bf16 %v237, %v237
    %v254 = vpack.c.bf16 %v238, %v238
    %v255 = vpack.c.bf16 %v239, %v239
    %v256 = vpack.c.bf16 %v240, %v240
    %v257 = vpack.c.bf16 %v241, %v241
    %v258 = vpack.c.bf16 %v242, %v242
    %v259 = vpack.c.bf16 %v243, %v243
    %v260 = vpack.c.bf16 %v244, %v244
    %v389 = vunpack.c.l.b16 %v44
    %v390 = vunpack.c.l.b16 %v45
    %v391 = vunpack.c.l.b16 %v46
    %v392 = vunpack.c.l.b16 %v47
    %v393 = vunpack.c.l.b16 %v48
    %v394 = vunpack.c.l.b16 %v49
    %v395 = vunpack.c.l.b16 %v50
    %v396 = vunpack.c.l.b16 %v51
    %v397 = vunpack.c.l.b16 %v52
    %v398 = vunpack.c.l.b16 %v53
    %v399 = vunpack.c.l.b16 %v54
    %v400 = vunpack.c.l.b16 %v55
    %v401 = vunpack.c.l.b16 %v56
    %v402 = vunpack.c.l.b16 %v57
    %v403 = vunpack.c.l.b16 %v58
    %v404 = vunpack.c.l.b16 %v59
    %v405 = vunpack.c.l.b16 %v60
    %v406 = vunpack.c.l.b16 %v61
    %v407 = vunpack.c.l.b16 %v62
    %v408 = vunpack.c.l.b16 %v63
    %v409 = vunpack.c.l.b16 %v64
    %v410 = vunpack.c.l.b16 %v65
    %v411 = vunpack.c.l.b16 %v66
    %v412 = vunpack.c.l.b16 %v67
    %v413 = vunpack.c.l.b16 %v68
    %v414 = vunpack.c.l.b16 %v69
    %v415 = vunpack.c.l.b16 %v70
    %v416 = vunpack.c.l.b16 %v71
    %v417 = vunpack.c.l.b16 %v72
    %v418 = vunpack.c.l.b16 %v73
    %v419 = vunpack.c.l.b16 %v74
    %v420 = vunpack.c.l.b16 %v75
    %v421 = vunpack.c.l.b16 %v76
    %v422 = vunpack.c.l.b16 %v77
    %v423 = vunpack.c.l.b16 %v78
    %v424 = vunpack.c.l.b16 %v79
    %v425 = vunpack.c.l.b16 %v80
    %v426 = vunpack.c.l.b16 %v81
    %v427 = vunpack.c.l.b16 %v82
    %v428 = vunpack.c.l.b16 %v83
    %v429 = vunpack.c.l.b16 %v84
    %v430 = vunpack.c.l.b16 %v85
    %v431 = vunpack.c.l.b16 %v86
    %v432 = vunpack.c.l.b16 %v87
    %v433 = vunpack.c.l.b16 %v88
    %v434 = vunpack.c.l.b16 %v89
    %v435 = vunpack.c.l.b16 %v90
    %v436 = vunpack.c.l.b16 %v91
    %v437 = vunpack.c.l.b16 %v92
    %v438 = vunpack.c.l.b16 %v93
    %v439 = vunpack.c.l.b16 %v94
    %v440 = vunpack.c.l.b16 %v95
    %v441 = vunpack.c.l.b16 %v96
    %v442 = vunpack.c.l.b16 %v97
    %v443 = vunpack.c.l.b16 %v98
    %v444 = vunpack.c.l.b16 %v99
    %v445 = vunpack.c.l.b16 %v100
    %v446 = vunpack.c.l.b16 %v101
    %v447 = vunpack.c.l.b16 %v102
    %v448 = vunpack.c.l.b16 %v103
    %v449 = vunpack.c.l.b16 %v104
    %v450 = vunpack.c.l.b16 %v105
    %v451 = vunpack.c.l.b16 %v106
    %v452 = vunpack.c.l.b16 %v107
    %v453 = vunpack.c.l.b16 %v108
    %v454 = vunpack.c.l.b16 %v109
    %v455 = vunpack.c.l.b16 %v110
    %v456 = vunpack.c.l.b16 %v111
    %v457 = vunpack.c.l.b16 %v112
    %v458 = vunpack.c.l.b16 %v113
    %v459 = vunpack.c.l.b16 %v114
    %v460 = vunpack.c.l.b16 %v115
    %v461 = vunpack.c.l.b16 %v116
    %v462 = vunpack.c.l.b16 %v117
    %v463 = vunpack.c.l.b16 %v118
    %v464 = vunpack.c.l.b16 %v119
    %v465 = vunpack.c.l.b16 %v120
    %v466 = vunpack.c.l.b16 %v121
    %v467 = vunpack.c.l.b16 %v122
    %v468 = vunpack.c.l.b16 %v123
    %v469 = vunpack.c.l.b16 %v124
    %v470 = vunpack.c.l.b16 %v125
    %v471 = vunpack.c.l.b16 %v126
    %v472 = vunpack.c.l.b16 %v127
    %v473 = vunpack.c.l.b16 %v128
    %v474 = vunpack.c.l.b16 %v129
    %v475 = vunpack.c.l.b16 %v130
    %v476 = vunpack.c.l.b16 %v131
    %v477 = vunpack.c.l.b16 %v132
    %v478 = vunpack.c.l.b16 %v133
    %v479 = vunpack.c.l.b16 %v134
    %v480 = vunpack.c.l.b16 %v135
    %v481 = vunpack.c.l.b16 %v136
    %v482 = vunpack.c.l.b16 %v137
    %v483 = vunpack.c.l.b16 %v138
    %v484 = vunpack.c.l.b16 %v139
    %v485 = vunpack.c.l.b16 %v140
    %v486 = vunpack.c.l.b16 %v141
    %v487 = vunpack.c.l.b16 %v142
    %v488 = vunpack.c.l.b16 %v143
    %v489 = vunpack.c.l.b16 %v144
    %v490 = vunpack.c.l.b16 %v145
    %v491 = vunpack.c.l.b16 %v146
    %v492 = vunpack.c.l.b16 %v147
    %v493 = vunpack.c.l.b16 %v148
    %v494 = vunpack.c.l.b16 %v149
    %v495 = vunpack.c.l.b16 %v150
    %v496 = vunpack.c.l.b16 %v151
    %v497 = vunpack.c.l.b16 %v152
    %v498 = vunpack.c.l.b16 %v153
    %v499 = vunpack.c.l.b16 %v154
    %v500 = vunpack.c.l.b16 %v155
    %v501 = vunpack.c.l.b16 %v156
    %v502 = vunpack.c.l.b16 %v157
    %v503 = vunpack.c.l.b16 %v158
    %v504 = vunpack.c.l.b16 %v159
    %v505 = vunpack.c.l.b16 %v160
    %v506 = vunpack.c.l.b16 %v161
    %v507 = vunpack.c.l.b16 %v162
    %v508 = vunpack.c.l.b16 %v163
    %v509 = vunpack.c.l.b16 %v164
    %v510 = vunpack.c.l.b16 %v165
    %v511 = vunpack.c.l.b16 %v166
    %v512 = vunpack.c.l.b16 %v167
    %v513 = vunpack.c.l.b16 %v168
    %v514 = vunpack.c.l.b16 %v169
    %v515 = vunpack.c.l.b16 %v170
    %v516 = vunpack.c.l.b16 %v171
    %v517 = vpack.c.b16 %v390, %v389
    %v518 = vpack.c.b16 %v392, %v391
    %v519 = vpack.c.b16 %v394, %v393
    %v520 = vpack.c.b16 %v396, %v395
    %v521 = vpack.c.b16 %v398, %v397
    %v522 = vpack.c.b16 %v400, %v399
    %v523 = vpack.c.b16 %v402, %v401
    %v524 = vpack.c.b16 %v404, %v403
    %v525 = vpack.c.b16 %v406, %v405
    %v526 = vpack.c.b16 %v408, %v407
    %v527 = vpack.c.b16 %v410, %v409
    %v528 = vpack.c.b16 %v412, %v411
    %v529 = vpack.c.b16 %v414, %v413
    %v530 = vpack.c.b16 %v416, %v415
    %v531 = vpack.c.b16 %v418, %v417
    %v532 = vpack.c.b16 %v420, %v419
    %v533 = vpack.c.b16 %v422, %v421
    %v534 = vpack.c.b16 %v424, %v423
    %v535 = vpack.c.b16 %v426, %v425
    %v536 = vpack.c.b16 %v428, %v427
    %v537 = vpack.c.b16 %v430, %v429
    %v538 = vpack.c.b16 %v432, %v431
    %v539 = vpack.c.b16 %v434, %v433
    %v540 = vpack.c.b16 %v436, %v435
    %v541 = vpack.c.b16 %v438, %v437
    %v542 = vpack.c.b16 %v440, %v439
    %v543 = vpack.c.b16 %v442, %v441
    %v544 = vpack.c.b16 %v444, %v443
    %v545 = vpack.c.b16 %v446, %v445
    %v546 = vpack.c.b16 %v448, %v447
    %v547 = vpack.c.b16 %v450, %v449
    %v548 = vpack.c.b16 %v452, %v451
    %v549 = vpack.c.b16 %v454, %v453
    %v550 = vpack.c.b16 %v456, %v455
    %v551 = vpack.c.b16 %v458, %v457
    %v552 = vpack.c.b16 %v460, %v459
    %v553 = vpack.c.b16 %v462, %v461
    %v554 = vpack.c.b16 %v464, %v463
    %v555 = vpack.c.b16 %v466, %v465
    %v556 = vpack.c.b16 %v468, %v467
    %v557 = vpack.c.b16 %v470, %v469
    %v558 = vpack.c.b16 %v472, %v471
    %v559 = vpack.c.b16 %v474, %v473
    %v560 = vpack.c.b16 %v476, %v475
    %v561 = vpack.c.b16 %v478, %v477
    %v562 = vpack.c.b16 %v480, %v479
    %v563 = vpack.c.b16 %v482, %v481
    %v564 = vpack.c.b16 %v484, %v483
    %v565 = vpack.c.b16 %v486, %v485
    %v566 = vpack.c.b16 %v488, %v487
    %v567 = vpack.c.b16 %v490, %v489
    %v568 = vpack.c.b16 %v492, %v491
    %v569 = vpack.c.b16 %v494, %v493
    %v570 = vpack.c.b16 %v496, %v495
    %v571 = vpack.c.b16 %v498, %v497
    %v572 = vpack.c.b16 %v500, %v499
    %v573 = vpack.c.b16 %v502, %v501
    %v574 = vpack.c.b16 %v504, %v503
    %v575 = vpack.c.b16 %v506, %v505
    %v576 = vpack.c.b16 %v508, %v507
    %v577 = vpack.c.b16 %v510, %v509
    %v578 = vpack.c.b16 %v512, %v511
    %v579 = vpack.c.b16 %v514, %v513
    %v580 = vpack.c.b16 %v516, %v515
    %645 = vmatpush.bf16.msra.mxu0 %v524
    %646 = vmatpush.bf16.msra.mxu0 %v523
    %647 = vmatpush.bf16.msra.mxu0 %v522
    %648 = vmatpush.bf16.msra.mxu0 %v521
    %649 = vmatpush.bf16.msra.mxu0 %v520
    %650 = vmatpush.bf16.msra.mxu0 %v519
    %651 = vmatpush.bf16.msra.mxu0 %v518
    %652 = vmatpush.bf16.msra.mxu0 %v517
    %653 = vmatmul.bf16.gmra.mxu0 %v253
    %v654 = vpop.f32.mrf.mxu0
    %v655 = vadd.f32 0.0, %v654
    %v656 = vpop.f32.mrf.mxu0
    %657 = vdwg.mxu0
    %658 = vmatpush.bf16.msra.mxu0 %v532
    %659 = vmatpush.bf16.msra.mxu0 %v531
    %660 = vmatpush.bf16.msra.mxu0 %v530
    %661 = vmatpush.bf16.msra.mxu0 %v529
    %662 = vmatpush.bf16.msra.mxu0 %v528
    %663 = vmatpush.bf16.msra.mxu0 %v527
    %664 = vmatpush.bf16.msra.mxu0 %v526
    %665 = vmatpush.bf16.msra.mxu0 %v525
    %666 = vmatmul.bf16.gmra.mxu0 %v254
    %v667 = vpop.f32.mrf.mxu0
    %v668 = vadd.f32 %v655, %v667
    %v669 = vpop.f32.mrf.mxu0
    %670 = vdwg.mxu0
    %671 = vmatpush.bf16.msra.mxu0 %v540
    %672 = vmatpush.bf16.msra.mxu0 %v539
    %673 = vmatpush.bf16.msra.mxu0 %v538
    %674 = vmatpush.bf16.msra.mxu0 %v537
    %675 = vmatpush.bf16.msra.mxu0 %v536
    %676 = vmatpush.bf16.msra.mxu0 %v535
    %677 = vmatpush.bf16.msra.mxu0 %v534
    %678 = vmatpush.bf16.msra.mxu0 %v533
    %679 = vmatmul.bf16.gmra.mxu0 %v255
    %v680 = vpop.f32.mrf.mxu0
    %v681 = vadd.f32 %v668, %v680
    %v682 = vpop.f32.mrf.mxu0
    %683 = vdwg.mxu0
    %684 = vmatpush.bf16.msra.mxu0 %v548
    %685 = vmatpush.bf16.msra.mxu0 %v547
    %686 = vmatpush.bf16.msra.mxu0 %v546
    %687 = vmatpush.bf16.msra.mxu0 %v545
    %688 = vmatpush.bf16.msra.mxu0 %v544
    %689 = vmatpush.bf16.msra.mxu0 %v543
    %690 = vmatpush.bf16.msra.mxu0 %v542
    %691 = vmatpush.bf16.msra.mxu0 %v541
    %692 = vmatmul.bf16.gmra.mxu0 %v256
    %v693 = vpop.f32.mrf.mxu0
    %v694 = vadd.f32 %v681, %v693
    %v695 = vpop.f32.mrf.mxu0
    %696 = vdwg.mxu0
    %697 = vmatpush.bf16.msra.mxu0 %v556
    %698 = vmatpush.bf16.msra.mxu0 %v555
    %699 = vmatpush.bf16.msra.mxu0 %v554
    %700 = vmatpush.bf16.msra.mxu0 %v553
    %701 = vmatpush.bf16.msra.mxu0 %v552
    %702 = vmatpush.bf16.msra.mxu0 %v551
    %703 = vmatpush.bf16.msra.mxu0 %v550
    %704 = vmatpush.bf16.msra.mxu0 %v549
    %705 = vmatmul.bf16.gmra.mxu0 %v257
    %v706 = vpop.f32.mrf.mxu0
    %v707 = vadd.f32 %v694, %v706
    %v708 = vpop.f32.mrf.mxu0
    %709 = vdwg.mxu0
    %710 = vmatpush.bf16.msra.mxu0 %v564
    %711 = vmatpush.bf16.msra.mxu0 %v563
    %712 = vmatpush.bf16.msra.mxu0 %v562
    %713 = vmatpush.bf16.msra.mxu0 %v561
    %714 = vmatpush.bf16.msra.mxu0 %v560
    %715 = vmatpush.bf16.msra.mxu0 %v559
    %716 = vmatpush.bf16.msra.mxu0 %v558
    %717 = vmatpush.bf16.msra.mxu0 %v557
    %718 = vmatmul.bf16.gmra.mxu0 %v258
    %v719 = vpop.f32.mrf.mxu0
    %v720 = vadd.f32 %v707, %v719
    %v721 = vpop.f32.mrf.mxu0
    %722 = vdwg.mxu0
    %723 = vmatpush.bf16.msra.mxu0 %v572
    %724 = vmatpush.bf16.msra.mxu0 %v571
    %725 = vmatpush.bf16.msra.mxu0 %v570
    %726 = vmatpush.bf16.msra.mxu0 %v569
    %727 = vmatpush.bf16.msra.mxu0 %v568
    %728 = vmatpush.bf16.msra.mxu0 %v567
    %729 = vmatpush.bf16.msra.mxu0 %v566
    %730 = vmatpush.bf16.msra.mxu0 %v565
    %731 = vmatmul.bf16.gmra.mxu0 %v259
    %v732 = vpop.f32.mrf.mxu0
    %v733 = vadd.f32 %v720, %v732
    %v734 = vpop.f32.mrf.mxu0
    %735 = vdwg.mxu0
    %736 = vmatpush.bf16.msra.mxu0 %v580
    %737 = vmatpush.bf16.msra.mxu0 %v579
    %738 = vmatpush.bf16.msra.mxu0 %v578
    %739 = vmatpush.bf16.msra.mxu0 %v577
    %740 = vmatpush.bf16.msra.mxu0 %v576
    %741 = vmatpush.bf16.msra.mxu0 %v575
    %742 = vmatpush.bf16.msra.mxu0 %v574
    %743 = vmatpush.bf16.msra.mxu0 %v573
    %744 = vmatmul.bf16.gmra.mxu0 %v260
    %v745 = vpop.f32.mrf.mxu0
    %v746 = vadd.f32 %v733, %v745
    %v747 = vpop.f32.mrf.mxu0
    %748 = vdwg.mxu0
    %v753 = vunpack.c.l.b16 %v193
    %v754 = vunpack.c.h.b16 %v193
    %v755 = vunpack.c.l.b16 %v194
    %v756 = vunpack.c.h.b16 %v194
    %v757 = vunpack.c.l.b16 %v195
    %v758 = vunpack.c.h.b16 %v195
    %v759 = vunpack.c.l.b16 %v196
    %v760 = vunpack.c.h.b16 %v196
    %v761 = vpack.c.b16 %v753, %v753
    %v762 = vpack.c.b16 %v754, %v754
    %v763 = vpack.c.b16 %v755, %v755
    %v764 = vpack.c.b16 %v756, %v756
    %v765 = vpack.c.b16 %v757, %v757
    %v766 = vpack.c.b16 %v758, %v758
    %v767 = vpack.c.b16 %v759, %v759
    %v768 = vpack.c.b16 %v760, %v760
    %777 = vmatpush.bf16.msra.mxu0 %v524
    %778 = vmatpush.bf16.msra.mxu0 %v523
    %779 = vmatpush.bf16.msra.mxu0 %v522
    %780 = vmatpush.bf16.msra.mxu0 %v521
    %781 = vmatpush.bf16.msra.mxu0 %v520
    %782 = vmatpush.bf16.msra.mxu0 %v519
    %783 = vmatpush.bf16.msra.mxu0 %v518
    %784 = vmatpush.bf16.msra.mxu0 %v517
    %785 = vmatmul.bf16.gmra.mxu0 %v761
    %v786 = vpop.f32.mrf.mxu0
    %v787 = vadd.f32 %v746, %v786
    %v788 = vpop.f32.mrf.mxu0
    %789 = vdwg.mxu0
    %790 = vmatpush.bf16.msra.mxu0 %v532
    %791 = vmatpush.bf16.msra.mxu0 %v531
    %792 = vmatpush.bf16.msra.mxu0 %v530
    %793 = vmatpush.bf16.msra.mxu0 %v529
    %794 = vmatpush.bf16.msra.mxu0 %v528
    %795 = vmatpush.bf16.msra.mxu0 %v527
    %796 = vmatpush.bf16.msra.mxu0 %v526
    %797 = vmatpush.bf16.msra.mxu0 %v525
    %798 = vmatmul.bf16.gmra.mxu0 %v762
    %v799 = vpop.f32.mrf.mxu0
    %v800 = vadd.f32 %v787, %v799
    %v801 = vpop.f32.mrf.mxu0
    %802 = vdwg.mxu0
    %803 = vmatpush.bf16.msra.mxu0 %v540
    %804 = vmatpush.bf16.msra.mxu0 %v539
    %805 = vmatpush.bf16.msra.mxu0 %v538
    %806 = vmatpush.bf16.msra.mxu0 %v537
    %807 = vmatpush.bf16.msra.mxu0 %v536
    %808 = vmatpush.bf16.msra.mxu0 %v535
    %809 = vmatpush.bf16.msra.mxu0 %v534
    %810 = vmatpush.bf16.msra.mxu0 %v533
    %811 = vmatmul.bf16.gmra.mxu0 %v763
    %v812 = vpop.f32.mrf.mxu0
    %v813 = vadd.f32 %v800, %v812
    %v814 = vpop.f32.mrf.mxu0
    %815 = vdwg.mxu0
    %816 = vmatpush.bf16.msra.mxu0 %v548
    %817 = vmatpush.bf16.msra.mxu0 %v547
    %818 = vmatpush.bf16.msra.mxu0 %v546
    %819 = vmatpush.bf16.msra.mxu0 %v545
    %820 = vmatpush.bf16.msra.mxu0 %v544
    %821 = vmatpush.bf16.msra.mxu0 %v543
    %822 = vmatpush.bf16.msra.mxu0 %v542
    %823 = vmatpush.bf16.msra.mxu0 %v541
    %824 = vmatmul.bf16.gmra.mxu0 %v764
    %v825 = vpop.f32.mrf.mxu0
    %v826 = vadd.f32 %v813, %v825
    %v827 = vpop.f32.mrf.mxu0
    %828 = vdwg.mxu0
    %829 = vmatpush.bf16.msra.mxu0 %v556
    %830 = vmatpush.bf16.msra.mxu0 %v555
    %831 = vmatpush.bf16.msra.mxu0 %v554
    %832 = vmatpush.bf16.msra.mxu0 %v553
    %833 = vmatpush.bf16.msra.mxu0 %v552
    %834 = vmatpush.bf16.msra.mxu0 %v551
    %835 = vmatpush.bf16.msra.mxu0 %v550
    %836 = vmatpush.bf16.msra.mxu0 %v549
    %837 = vmatmul.bf16.gmra.mxu0 %v765
    %v838 = vpop.f32.mrf.mxu0
    %v839 = vadd.f32 %v826, %v838
    %v840 = vpop.f32.mrf.mxu0
    %841 = vdwg.mxu0
    %842 = vmatpush.bf16.msra.mxu0 %v564
    %843 = vmatpush.bf16.msra.mxu0 %v563
    %844 = vmatpush.bf16.msra.mxu0 %v562
    %845 = vmatpush.bf16.msra.mxu0 %v561
    %846 = vmatpush.bf16.msra.mxu0 %v560
    %847 = vmatpush.bf16.msra.mxu0 %v559
    %848 = vmatpush.bf16.msra.mxu0 %v558
    %849 = vmatpush.bf16.msra.mxu0 %v557
    %850 = vmatmul.bf16.gmra.mxu0 %v766
    %v851 = vpop.f32.mrf.mxu0
    %v852 = vadd.f32 %v839, %v851
    %v853 = vpop.f32.mrf.mxu0
    %854 = vdwg.mxu0
    %855 = vmatpush.bf16.msra.mxu0 %v572
    %856 = vmatpush.bf16.msra.mxu0 %v571
    %857 = vmatpush.bf16.msra.mxu0 %v570
    %858 = vmatpush.bf16.msra.mxu0 %v569
    %859 = vmatpush.bf16.msra.mxu0 %v568
    %860 = vmatpush.bf16.msra.mxu0 %v567
    %861 = vmatpush.bf16.msra.mxu0 %v566
    %862 = vmatpush.bf16.msra.mxu0 %v565
    %863 = vmatmul.bf16.gmra.mxu0 %v767
    %v864 = vpop.f32.mrf.mxu0
    %v865 = vadd.f32 %v852, %v864
    %v866 = vpop.f32.mrf.mxu0
    %867 = vdwg.mxu0
    %868 = vmatpush.bf16.msra.mxu0 %v580
    %869 = vmatpush.bf16.msra.mxu0 %v579
    %870 = vmatpush.bf16.msra.mxu0 %v578
    %871 = vmatpush.bf16.msra.mxu0 %v577
    %872 = vmatpush.bf16.msra.mxu0 %v576
    %873 = vmatpush.bf16.msra.mxu0 %v575
    %874 = vmatpush.bf16.msra.mxu0 %v574
    %875 = vmatpush.bf16.msra.mxu0 %v573
    %876 = vmatmul.bf16.gmra.mxu0 %v768
    %v877 = vpop.f32.mrf.mxu0
    %v878 = vadd.f32 %v865, %v877
    %v879 = vpop.f32.mrf.mxu0
    %880 = vdwg.mxu0
    %v881 = vmul.f32 %v878, 0.00390625
    %882 = vst [vmem:[#allocation7] sm:$0x3] %v881
    // Predicated region
    $region18: #{tpu_custom_call.1} parent=1 // pred_check
      _
    $region19: #{tpu_custom_call.1} parent=1 // pred_check_branch
      %884 = sbr.rel (0) target = $region21
    $region20: #{tpu_custom_call.1} parent=1 // pred_region
      %886 = vsyncadd [#allocation4], 0
      %s888 = sshll.u32 [#allocation7], 4
      %s889 = int_to_ptr.vmem [resolvable:$true] %s888
      %s890 = sshll.u32 %s2, 4
      %s891 = int_to_ptr.hbm [resolvable:$true] %s890
      %893 = dma.vmem_to_hbm [thread:$0]  %s889, 32, %s891, [#allocation4]
    $region21: #{tpu_custom_call.1} parent=1 // pred_fallthru
      _
    // Predicated region
    $region22: #{tpu_custom_call.1} parent=1 // pred_check
      _
    $region23: #{tpu_custom_call.1} parent=1 // pred_check_branch
      %895 = sbr.rel (0) target = $region25
    $region24: #{tpu_custom_call.1} parent=1 // pred_region
      %897 = dma.done [#allocation4], 32
    $region25: #{tpu_custom_call.1} parent=1 // pred_fallthru
      _
    %898 = vsyncpa [#allocation3], 1
    %899 = vsyncpa [#allocation6], 1
    %900 = vsyncpa [#allocation4], 1

</llo_original>
